<compile_context>
chip_gen: v5e
topology: v5e:2x2
jax: 0.10.0
libtpu: 0.0.40
codegen_flags: <defaults>
</compile_context>

<pallas_src>
import functools
import math

import jax
import jax.numpy as jnp
from jax.experimental import pallas as pl
from jax.experimental.pallas import tpu as pltpu

P_DROP = 0.1
LN_EPS = 1e-5
_INV_SQRT2 = 1.0 / math.sqrt(2.0)
_DROP_THRESHOLD_U32 = int(round(P_DROP * (2 ** 32)))  # keep iff bits >= threshold


def _round_up(a: int, m: int) -> int:
    return (a + m - 1) // m * m


def _vmem_budgets():
    """(tile-selection budget, vmem_limit_bytes), generation aware.
    v5e/v6e have 128 MiB physical VMEM; v7x has 64 MiB per TensorCore."""
    mib = 1024 * 1024
    try:
        cap = int(getattr(pltpu.get_tpu_info(), "vmem_capacity_bytes", 0) or 0)
    except Exception:
        cap = 0
    if cap >= 96 * mib:          # v5e / v6e
        return 48 * mib, 80 * mib
    if cap > 0:                  # v7x (64 MiB / TC)
        return 32 * mib, 48 * mib
    return 24 * mib, 40 * mib    # unknown backend: conservative


def _pick_tiles(m_rows, f_in_p, f_out_p, in_bytes, out_bytes, training, budget):
    """Choose (TM budget, TK).  TK always divides f_in_p; TM is budgeted so that
    double-buffered x/out blocks, the weight blocks, the f32 accumulator and the
    epilogue temporaries all fit inside `budget`."""
    temps = 6 if training else 4          # f32 [TM, F_out] epilogue slabs

    def max_tm(tk):
        fixed = 2 * tk * f_out_p * in_bytes + 3 * f_out_p * 4   # w blocks + b/γ/β
        per_row = (2 * tk * in_bytes                 # x (double-buffered)
                   + 2 * f_out_p * out_bytes         # out (double-buffered)
                   + (1 + temps) * f_out_p * 4)      # acc + epilogue temporaries
        avail = budget - fixed
        return avail // per_row if avail > 0 else 0

    # TK candidates: divisors of the padded F_in that are multiples of 128.
    q = f_in_p // 128
    cands = [128 * d for d in range(q, 0, -1) if q % d == 0]   # descending

    target_tm = min(_round_up(m_rows, 8), 256)
    chosen_tk = cands[0]                    # full F_in: weight fully resident
    if max_tm(chosen_tk) < target_tm and len(cands) > 1:
        # Stream K: the smallest TK >= 256 maximizes TM (fewest weight re-reads
        # per output row) while keeping each dot at MXU-native contraction depth.
        rest = cands[1:]
        pref = [tk for tk in rest if tk >= 256]
        chosen_tk = min(pref) if pref else max(rest)

    tm_budget = max(min(max_tm(chosen_tk), 1024, _round_up(m_rows, 8)), 8)
    return tm_budget, chosen_tk


def _choose_tm_for_m(m_rows, tm_budget):
    """Prefer an M tile that exactly divides M (no wrapper pad / output slice)."""
    if m_rows <= tm_budget:
        return m_rows, False           # single M tile (full-dim block is allowed)
    if m_rows % 8 != 0:
        return tm_budget, True
    d = (tm_budget // 8) * 8
    while d >= 8:
        if m_rows % d == 0:
            break
        d -= 8
    if d >= min(tm_budget, 128):
        return d, False
    return tm_budget, True


def _mxu_round(tm):
    if tm >= 256:
        return (tm // 256) * 256
    if tm >= 128:
        return 128
    return max((tm // 8) * 8, 8)


def _single_buffered(block_shape, index_map):
    """BlockSpec for an input whose block index never changes: single-buffered
    (the second pipeline buffer would be pure VMEM waste)."""
    buffered = getattr(pl, "Buffered", None)
    if buffered is not None:
        try:
            return pl.BlockSpec(block_shape, index_map,
                                pipeline_mode=buffered(1))
        except TypeError:
            pass
    return pl.BlockSpec(block_shape, index_map)


def _dense_block_kernel(seed_ref, x_ref, w_ref, vecs_ref, o_ref, acc_ref, *,
                        training: bool, n_valid: int, approx_gelu: bool):
    # x_ref: [TM, TK]   w_ref: [TK, F_out_p]   vecs_ref: [3, F_out_p] (bias, γ, β)
    # o_ref: [TM, F_out_p]   acc_ref: f32 [TM, F_out_p] scratch, resident over k.
    k = pl.program_id(1)

    @pl.when(k == 0)
    def _init():
        # Fold the bias add into the accumulator init.
        acc_ref[...] = jnp.broadcast_to(vecs_ref[0:1, :], acc_ref.shape)

    # Native-dtype operands straight to the MXU, f32 accumulation.
    acc_ref[...] += jnp.dot(x_ref[...], w_ref[...],
                            preferred_element_type=jnp.float32)

    @pl.when(k == pl.num_programs(1) - 1)
    def _epilogue():
        y = acc_ref[...]
        gamma = vecs_ref[1:2, :]
        beta = vecs_ref[2:3, :]

        # LayerNorm over the real feature axis.  Padded columns of y are exactly
        # zero (zero weight columns + zero bias), so the row sums only see real
        # features; the centered tensor is masked so the variance does too.
        inv_n = jnp.float32(1.0 / n_valid)
        mean = jnp.sum(y, axis=-1, keepdims=True) * inv_n
        if n_valid == y.shape[-1]:
            centered = y - mean
        else:
            col = jax.lax.broadcasted_iota(jnp.int32, y.shape, dimension=1)
            centered = jnp.where(col < n_valid, y - mean, 0.0)
        var = jnp.sum(centered * centered, axis=-1, keepdims=True) * inv_n
        y_hat = centered * jax.lax.rsqrt(var + LN_EPS)
        y_hat = y_hat * gamma + beta

        if approx_gelu:
            # tanh approximation runs on the (otherwise idle) EUP slot; numerics
            # differ slightly from nn.GELU()'s exact erf form.
            g = jax.nn.gelu(y_hat, approximate=True)
        else:
            g = 0.5 * y_hat * (1.0 + jax.lax.erf(y_hat * _INV_SQRT2))

        if training:
            # Scaled inverted dropout via the TPU HW PRNG: integer threshold
            # compare on raw bits; grid index folded into the seed so every M
            # tile draws an independent mask.
            pltpu.prng_seed(seed_ref[0], pl.program_id(0))
            bits = pltpu.bitcast(pltpu.prng_random_bits(g.shape), jnp.uint32)
            keep = bits >= jnp.uint32(_DROP_THRESHOLD_U32)
            g = jnp.where(keep, g * (1.0 / (1.0 - P_DROP)), 0.0)

        o_ref[...] = g.astype(o_ref.dtype)


def dense_dropout_block(x, w, b, gamma, beta, *, training=False, seed=0,
                        approx_gelu=False, cast_to_bf16=False):
    """x: [B, S, F_in] -> [B, S, F_out].  w: [F_in, F_out]; b/gamma/beta: [F_out]."""
    B, S, F_in = x.shape
    F_out = w.shape[-1]
    M = B * S

    # Lane-dense padding of the feature axes (multiples of 128).
    f_in_p = _round_up(F_in, 128)
    f_out_p = _round_up(F_out, 128)

    compute_dtype = jnp.bfloat16 if cast_to_bf16 else x.dtype
    in_bytes = jnp.dtype(compute_dtype).itemsize
    out_bytes = jnp.dtype(x.dtype).itemsize

    budget, vmem_limit = _vmem_budgets()
    tm_budget, tk = _pick_tiles(M, f_in_p, f_out_p, in_bytes, out_bytes,
                                training, budget)
    tm, pad_m = _choose_tm_for_m(M, tm_budget)
    if pad_m:
        tm = _mxu_round(tm_budget)     # no clean divisor: MXU-friendly + M pad
    m_pad = _round_up(M, tm)

    x2 = x.reshape(M, F_in)
    if cast_to_bf16 and x2.dtype != jnp.bfloat16:
        x2 = x2.astype(jnp.bfloat16)
        w = w.astype(jnp.bfloat16)
    if m_pad != M or f_in_p != F_in:
        x2 = jnp.pad(x2, ((0, m_pad - M), (0, f_in_p - F_in)))
    wp = w
    if f_in_p != F_in or f_out_p != F_out:
        wp = jnp.pad(w, ((0, f_in_p - F_in), (0, f_out_p - F_out)))

    # Pack bias / gamma / beta into one tiny (3, F_out_p) slab (single DMA).
    vecs = jnp.stack([jnp.asarray(v, jnp.float32).reshape(-1)
                      for v in (b, gamma, beta)], axis=0)
    if f_out_p != F_out:
        vecs = jnp.pad(vecs, ((0, 0), (0, f_out_p - F_out)))

    n_k = f_in_p // tk
    kernel = functools.partial(_dense_block_kernel, training=training,
                               n_valid=F_out, approx_gelu=approx_gelu)

    # Weight: streamed (double-buffered) over K, but single-buffered when it is
    # fully resident (constant block index).
    w_spec = (_single_buffered((tk, f_out_p), lambda i, k, *_: (k, 0))
              if n_k == 1 else
              pl.BlockSpec((tk, f_out_p), lambda i, k, *_: (k, 0)))

    # TODO(synk): bump the x spec to pl.Buffered(3) if xprof shows exposed x-tile
    # DMA (short per-step compute at small F_out).
    out2 = pl.pallas_call(
        kernel,
        out_shape=jax.ShapeDtypeStruct((m_pad, f_out_p), x.dtype),
        grid_spec=pltpu.PrefetchScalarGridSpec(
            num_scalar_prefetch=1,                         # dropout seed -> SMEM
            grid=(m_pad // tm, n_k),
            in_specs=[
                pl.BlockSpec((tm, tk), lambda i, k, *_: (i, k)),          # x tile
                w_spec,                                                   # weight
                _single_buffered((3, f_out_p), lambda i, k, *_: (0, 0)),  # b/γ/β
            ],
            out_specs=pl.BlockSpec((tm, f_out_p), lambda i, k, *_: (i, 0)),
            scratch_shapes=[pltpu.VMEM((tm, f_out_p), jnp.float32)],      # f32 acc
        ),
        compiler_params=pltpu.CompilerParams(
            dimension_semantics=("parallel", "arbitrary"),  # megacore-shard M
            vmem_limit_bytes=vmem_limit,
        ),
    )(jnp.array([seed], dtype=jnp.int32), x2, wp, vecs)

    if m_pad != M or f_out_p != F_out:
        out2 = out2[:M, :F_out]
    return out2.reshape(B, S, F_out)


def _reference(x, w, b, gamma, beta):
    y = jnp.einsum("bsf,fo->bso", x, w) + b
    mean = jnp.mean(y, axis=-1, keepdims=True)
    var = jnp.mean(jnp.square(y - mean), axis=-1, keepdims=True)
    y_hat = (y - mean) / jnp.sqrt(var + LN_EPS)
    y_hat = y_hat * gamma + beta
    return 0.5 * y_hat * (1.0 + jax.lax.erf(y_hat * _INV_SQRT2))


if __name__ == "__main__":
    B, S, F_in, F_out = 2, 8, 32, 32

    key = jax.random.PRNGKey(0)
    kx, kw, kb = jax.random.split(key, 3)
    x = jax.random.normal(kx, (B, S, F_in), dtype=jnp.float32)

    # PyTorch Linear-style uniform init; LayerNorm affine = (ones, zeros).
    bound = 1.0 / math.sqrt(F_in)
    w = jax.random.uniform(kw, (F_in, F_out), jnp.float32, -bound, bound)
    b = jax.random.uniform(kb, (F_out,), jnp.float32, -bound, bound)
    gamma = jnp.ones((F_out,), jnp.float32)
    beta = jnp.zeros((F_out,), jnp.float32)

    # Eval mode (dropout = identity) — deterministic, checked against reference.
    out = jax.block_until_ready(
        dense_dropout_block(x, w, b, gamma, beta, training=False))
    ref = _reference(x, w, b, gamma, beta)
    assert out.shape == (B, S, F_out)
    assert jnp.allclose(out, ref, atol=1e-4, rtol=1e-4), "mismatch vs reference"

    # Training-mode dropout uses the TPU hardware PRNG, which has no
    # interpret/CPU lowering — only exercise it on a real TPU backend.
    if jax.devices()[0].platform == "tpu":
        out_train = jax.block_until_ready(
            dense_dropout_block(x, w, b, gamma, beta, training=True, seed=1234))
        assert out_train.shape == (B, S, F_out)

    print("KERNEL_OK")
</pallas_src>

<mosaic_0001>
module attributes {stable_mosaic.version = 11 : i64} {
  func.func @_dense_block_kernel(%arg0: i32, %arg1: i32, %arg2: memref<1xi32, #tpu.memory_space<smem>>, %arg3: memref<16x128xf32, #tpu.memory_space<vmem>>, %arg4: memref<128x128xf32, #tpu.memory_space<vmem>>, %arg5: memref<3x128xf32, #tpu.memory_space<vmem>>, %arg6: memref<16x128xf32, #tpu.memory_space<vmem>>, %arg7: memref<16x128xf32, #tpu.memory_space<vmem>>) attributes {dimension_semantics = [#tpu.dimension_semantics<parallel>, #tpu.dimension_semantics<arbitrary>], iteration_bounds = array<i64: 1, 1>, scalar_prefetch = 1 : i64, scratch_operands = 1 : i64, tpu.core_type = #tpu.core_type<tc>, window_params = [{transform_indices = @transform_0, window_bounds = array<i64: 16, 128>}, {pipeline_mode = #tpu.pipeline_mode<synchronous>, transform_indices = @transform_1, window_bounds = array<i64: 128, 128>}, {pipeline_mode = #tpu.pipeline_mode<synchronous>, transform_indices = @transform_2, window_bounds = array<i64: 3, 128>}, {transform_indices = @transform_3, window_bounds = array<i64: 16, 128>}]} {
    %c0_i32 = arith.constant 0 : i32
    %0 = arith.cmpi eq, %arg1, %c0_i32 : i32
    %1 = arith.extui %0 : i1 to i32
    %c0_i32_0 = arith.constant 0 : i32
    %2 = arith.cmpi ne, %1, %c0_i32_0 : i32
    scf.if %2 {
      %c0_10 = arith.constant 0 : index
      %c0_11 = arith.constant 0 : index
      %12 = vector.load %arg5[%c0_10, %c0_11] : memref<3x128xf32, #tpu.memory_space<vmem>>, vector<1x128xf32>
      %13 = vector.shape_cast %12 : vector<1x128xf32> to vector<1x128xf32>
      %14 = vector.broadcast %13 : vector<1x128xf32> to vector<16x128xf32>
      %c0_12 = arith.constant 0 : index
      %c0_13 = arith.constant 0 : index
      %15 = vector.load %arg7[%c0_12, %c0_13] : memref<16x128xf32, #tpu.memory_space<vmem>>, vector<16x128xf32>
      tpu.vector_store %arg7[%c0_12, %c0_13], %14 {strides = array<i32>} : memref<16x128xf32, #tpu.memory_space<vmem>>, vector<16x128xf32>,
    } else {
    }
    %c0 = arith.constant 0 : index
    %c0_1 = arith.constant 0 : index
    %3 = vector.load %arg7[%c0, %c0_1] : memref<16x128xf32, #tpu.memory_space<vmem>>, vector<16x128xf32>
    %c0_2 = arith.constant 0 : index
    %c0_3 = arith.constant 0 : index
    %4 = vector.load %arg3[%c0_2, %c0_3] : memref<16x128xf32, #tpu.memory_space<vmem>>, vector<16x128xf32>
    %c0_4 = arith.constant 0 : index
    %c0_5 = arith.constant 0 : index
    %5 = vector.load %arg4[%c0_4, %c0_5] : memref<128x128xf32, #tpu.memory_space<vmem>>, vector<128x128xf32>
    %cst = arith.constant dense<0.000000e+00> : vector<16x128xf32>
    %6 = tpu.matmul %4, %5, %cst {dimension_numbers = #tpu.dot_dimension_numbers<[1], [0], [0], [1], [0, 0, 1, 1], [], []>} : vector<16x128xf32>, vector<128x128xf32>, vector<16x128xf32> -> vector<16x128xf32>
    %7 = arith.addf %3, %6 : vector<16x128xf32>
    %c0_6 = arith.constant 0 : index
    %c0_7 = arith.constant 0 : index
    %8 = vector.load %arg7[%c0_6, %c0_7] : memref<16x128xf32, #tpu.memory_space<vmem>>, vector<16x128xf32>
    tpu.vector_store %arg7[%c0_6, %c0_7], %7 {strides = array<i32>} : memref<16x128xf32, #tpu.memory_space<vmem>>, vector<16x128xf32>,
    %c0_i32_8 = arith.constant 0 : i32
    %9 = arith.cmpi eq, %arg1, %c0_i32_8 : i32
    %10 = arith.extui %9 : i1 to i32
    %c0_i32_9 = arith.constant 0 : i32
    %11 = arith.cmpi ne, %10, %c0_i32_9 : i32
    scf.if %11 {
      %c0_10 = arith.constant 0 : index
      %c0_11 = arith.constant 0 : index
      %12 = vector.load %arg7[%c0_10, %c0_11] : memref<16x128xf32, #tpu.memory_space<vmem>>, vector<16x128xf32>
      %c1 = arith.constant 1 : index
      %c0_12 = arith.constant 0 : index
      %13 = vector.load %arg5[%c1, %c0_12] : memref<3x128xf32, #tpu.memory_space<vmem>>, vector<1x128xf32>
      %c2 = arith.constant 2 : index
      %c0_13 = arith.constant 0 : index
      %14 = vector.load %arg5[%c2, %c0_13] : memref<3x128xf32, #tpu.memory_space<vmem>>, vector<1x128xf32>
      %cst_14 = arith.constant dense<0.000000e+00> : vector<16xf32>
      %15 = vector.multi_reduction <add>, %12, %cst_14 [1] : vector<16x128xf32> to vector<16xf32>
      %16 = vector.shape_cast %15 : vector<16xf32> to vector<16x1xf32>
      %cst_15 = arith.constant 3.125000e-02 : f32
      %17 = vector.broadcast %cst_15 : f32 to vector<16x1xf32>
      %18 = arith.mulf %16, %17 : vector<16x1xf32>
      %19 = tpu.iota {dimensions = array<i32: 1>} : vector<16x128xi32>
      %c32_i32 = arith.constant 32 : i32
      %20 = vector.broadcast %c32_i32 : i32 to vector<16x128xi32>
      %21 = arith.cmpi slt, %19, %20 : vector<16x128xi32>
      %22 = vector.broadcast %18 : vector<16x1xf32> to vector<16x128xf32>
      %23 = arith.subf %12, %22 : vector<16x128xf32>
      %cst_16 = arith.constant 0.000000e+00 : f32
      %24 = vector.broadcast %cst_16 : f32 to vector<16x128xf32>
      %25 = arith.select %21, %23, %24 : vector<16x128xi1>, vector<16x128xf32>
      %26 = arith.mulf %25, %25 : vector<16x128xf32>
      %cst_17 = arith.constant dense<0.000000e+00> : vector<16xf32>
      %27 = vector.multi_reduction <add>, %26, %cst_17 [1] : vector<16x128xf32> to vector<16xf32>
      %28 = vector.shape_cast %27 : vector<16xf32> to vector<16x1xf32>
      %cst_18 = arith.constant 3.125000e-02 : f32
      %29 = vector.broadcast %cst_18 : f32 to vector<16x1xf32>
      %30 = arith.mulf %28, %29 : vector<16x1xf32>
      %cst_19 = arith.constant 9.99999974E-6 : f32
      %31 = vector.broadcast %cst_19 : f32 to vector<16x1xf32>
      %32 = arith.addf %30, %31 : vector<16x1xf32>
      %33 = math.rsqrt %32 : vector<16x1xf32>
      %34 = vector.broadcast %33 : vector<16x1xf32> to vector<16x128xf32>
      %35 = arith.mulf %25, %34 : vector<16x128xf32>
      %36 = vector.broadcast %13 : vector<1x128xf32> to vector<16x128xf32>
      %37 = arith.mulf %35, %36 : vector<16x128xf32>
      %38 = vector.broadcast %14 : vector<1x128xf32> to vector<16x128xf32>
      %39 = arith.addf %37, %38 : vector<16x128xf32>
      %cst_20 = arith.constant 5.000000e-01 : f32
      %40 = vector.broadcast %cst_20 : f32 to vector<16x128xf32>
      %41 = arith.mulf %40, %39 : vector<16x128xf32>
      %cst_21 = arith.constant 0.707106769 : f32
      %42 = vector.broadcast %cst_21 : f32 to vector<16x128xf32>
      %43 = arith.mulf %39, %42 : vector<16x128xf32>
      %44 = math.erf %43 : vector<16x128xf32>
      %cst_22 = arith.constant 1.000000e+00 : f32
      %45 = vector.broadcast %cst_22 : f32 to vector<16x128xf32>
      %46 = arith.addf %45, %44 : vector<16x128xf32>
      %47 = arith.mulf %41, %46 : vector<16x128xf32>
      %c0_23 = arith.constant 0 : index
      %c0_24 = arith.constant 0 : index
      %48 = vector.load %arg6[%c0_23, %c0_24] : memref<16x128xf32, #tpu.memory_space<vmem>>, vector<16x128xf32>
      tpu.vector_store %arg6[%c0_23, %c0_24], %47 {strides = array<i32>} : memref<16x128xf32, #tpu.memory_space<vmem>>, vector<16x128xf32>,
    } else {
    }
    return
  }
  func.func @transform_0(%arg0: i32, %arg1: i32, %arg2: memref<1xi32, #tpu.memory_space<smem>>) -> (i32, i32) {
    %c0_i32 = arith.constant 0 : i32
    return %arg0, %arg1 : i32, i32
  }
  func.func @transform_1(%arg0: i32, %arg1: i32, %arg2: memref<1xi32, #tpu.memory_space<smem>>) -> (i32, i32) {
    %c0_i32 = arith.constant 0 : i32
    %c0_i32_0 = arith.constant 0 : i32
    return %arg1, %c0_i32 : i32, i32
  }
  func.func @transform_2(%arg0: i32, %arg1: i32, %arg2: memref<1xi32, #tpu.memory_space<smem>>) -> (i32, i32) {
    %c0_i32 = arith.constant 0 : i32
    %c0_i32_0 = arith.constant 0 : i32
    %c0_i32_1 = arith.constant 0 : i32
    return %c0_i32, %c0_i32_0 : i32, i32
  }
  func.func @transform_3(%arg0: i32, %arg1: i32, %arg2: memref<1xi32, #tpu.memory_space<smem>>) -> (i32, i32) {
    %c0_i32 = arith.constant 0 : i32
    %c0_i32_0 = arith.constant 0 : i32
    return %arg0, %c0_i32 : i32, i32
  }
}

</mosaic_0001>

<llo_original>
// kernel: tpu_custom_call.1
$region0: #{tpu_custom_call.1}
  #allocation0 [shape = 'u32[]', space=smem, size = 0x4, offset = 0x4, fixed_abs, tag = 'smem constant byte address 0x4 - core index']
  #allocation1 [shape = 'u32[72,128]{1,0:T(1,128)}', space=vmem, size = 0x9000, scoped, tag = 'internal scratch']
  #allocation2 [shape = 'f32[16,128]{1,0:T(8,128)}', space=vmem, size = 0x2000, scoped, tag = 'scratch operand']
  #allocation3 [shape = 's32[1]{0}', space=sflag, size = 0x4, scoped, tag = 'scoped memory for tpu_custom_call.1']
  #allocation4 [shape = 's32[1]{0:T(128)S(6)}', space=smem, size = 0x200, scoped, tag = 'prefetched SMEM operand 0']
  %s0 = inlined_call_operand.<no memory space> [shape: s32[1], index: 0, kind: input, shape index: {}]
  %s1 = inlined_call_operand.hbm [shape: f32[16,128], index: 1, kind: input, shape index: {}]
  %s2 = inlined_call_operand.hbm [shape: f32[128,128], index: 2, kind: input, shape index: {}]
  %s3 = inlined_call_operand.hbm [shape: f32[3,128], index: 3, kind: input, shape index: {}]
  %s4 = inlined_call_operand.hbm [shape: f32[16,128], index: 4, kind: output, shape index: {}]
  %s5 = sld [smem:[#allocation0]]
  $region42: #{tpu_custom_call.1} parent=0
    _
  %s7 = ssub.s32 1, %s5
  %s8 = scalar_select 0, %s7, %s5
  %9 = sst [smem:[#allocation4]] %s0
  $region1: #{tpu_custom_call.1} parent=0
    #allocation5 [shape = 'u8[8192]{0}', space=vmem, size = 0x2000, scoped, tag = 'input window, operand 1, single buffered']
    #allocation6 [shape = 's32[1]{0}', space=sflag, size = 0x4, scoped, tag = 'scoped memory for tpu_custom_call.1']
    #allocation7 [shape = 's32[1]{0}', space=sflag, size = 0x4, scoped, tag = 'scoped memory for tpu_custom_call.1']
    #allocation8 [shape = 'u8[65536]{0}', space=vmem, size = 0x10000, scoped, tag = 'input window, operand 2, single buffered']
    #allocation9 [shape = 's32[1]{0}', space=sflag, size = 0x4, scoped, tag = 'scoped memory for tpu_custom_call.1']
    #allocation10 [shape = 'u8[2048]{0}', space=vmem, size = 0x800, scoped, tag = 'input window, operand 3, single buffered']
    #allocation11 [shape = 'u8[8192]{0}', space=vmem, size = 0x2000, scoped, tag = 'output window, operand 0, single buffered']
    %10 = vsyncpa [#allocation6], 0
    %11 = vsyncpa [#allocation9], 0
    %12 = vsyncpa [#allocation7], 0
    // Predicated region
    $region2: #{tpu_custom_call.1} parent=1 // pred_check
      _
    $region3: #{tpu_custom_call.1} parent=1 // pred_check_branch
      %14 = sbr.rel (0) target = $region5
    $region4: #{tpu_custom_call.1} parent=1 // pred_region
      %16 = vsyncadd [#allocation6], 0
      %s17 = sshll.u32 %s1, 4
      %s18 = int_to_ptr.hbm [resolvable:$true] %s17
      %s19 = sshll.u32 [#allocation5], 4
      %s20 = int_to_ptr.vmem [resolvable:$true] %s19
      %25 = dma.hbm_to_vmem [thread:$0]  %s18, 256, %s20, [#allocation6], 128, 128, 8
    $region5: #{tpu_custom_call.1} parent=1 // pred_fallthru
      _
    // Predicated region
    $region6: #{tpu_custom_call.1} parent=1 // pred_check
      _
    $region7: #{tpu_custom_call.1} parent=1 // pred_check_branch
      %27 = sbr.rel (0) target = $region9
    $region8: #{tpu_custom_call.1} parent=1 // pred_region
      %29 = vsyncadd [#allocation9], 0
      %s30 = sshll.u32 %s2, 4
      %s31 = int_to_ptr.hbm [resolvable:$true] %s30
      %s32 = sshll.u32 [#allocation8], 4
      %s33 = int_to_ptr.vmem [resolvable:$true] %s32
      %38 = dma.hbm_to_vmem [thread:$0]  %s31, 2048, %s33, [#allocation9], 128, 128, 8
    $region9: #{tpu_custom_call.1} parent=1 // pred_fallthru
      _
    // Predicated region
    $region10: #{tpu_custom_call.1} parent=1 // pred_check
      _
    $region11: #{tpu_custom_call.1} parent=1 // pred_check_branch
      %40 = sbr.rel (0) target = $region13
    $region12: #{tpu_custom_call.1} parent=1 // pred_region
      %42 = vsyncadd [#allocation9], 0
      %s44 = sshll.u32 %s3, 4
      %s45 = int_to_ptr.hbm [resolvable:$true] %s44
      %s46 = sshll.u32 [#allocation10], 4
      %s47 = int_to_ptr.vmem [resolvable:$true] %s46
      %49 = dma.hbm_to_vmem [thread:$0]  %s45, 64, %s47, [#allocation9]
    $region13: #{tpu_custom_call.1} parent=1 // pred_fallthru
      _
    // Predicated region
    $region14: #{tpu_custom_call.1} parent=1 // pred_check
      _
    $region15: #{tpu_custom_call.1} parent=1 // pred_check_branch
      %51 = sbr.rel (0) target = $region17
    $region16: #{tpu_custom_call.1} parent=1 // pred_region
      %53 = dma.done [#allocation6], 256
    $region17: #{tpu_custom_call.1} parent=1 // pred_fallthru
      _
    // Predicated region
    $region18: #{tpu_custom_call.1} parent=1 // pred_check
      _
    $region19: #{tpu_custom_call.1} parent=1 // pred_check_branch
      %55 = sbr.rel (0) target = $region21
    $region20: #{tpu_custom_call.1} parent=1 // pred_region
      %57 = dma.done [#allocation9], 2048
    $region21: #{tpu_custom_call.1} parent=1 // pred_fallthru
      _
    // Predicated region
    $region22: #{tpu_custom_call.1} parent=1 // pred_check
      _
    $region23: #{tpu_custom_call.1} parent=1 // pred_check_branch
      %59 = sbr.rel (0) target = $region25
    $region24: #{tpu_custom_call.1} parent=1 // pred_region
      %61 = dma.done [#allocation9], 64
    $region25: #{tpu_custom_call.1} parent=1 // pred_fallthru
      _
    %p62 = scmp.eq.s32.totalorder 0, 0
    // Predicated region
    $region26: #{tpu_custom_call.1} parent=1 // pred_check
      %p63 = pneg %p62
    $region27: #{tpu_custom_call.1} parent=1 // pred_check_branch
      %65 = sbr.rel (%p63) target = $region29
    $region28: #{tpu_custom_call.1} parent=1 // pred_region
      %v66 = vld [vmem:[#allocation10] sm:$0x1]
      %v67 = vperm.slane %v66, 0
      %68 = vst [vmem:[#allocation2] sm:$0xff] %v67
      %69 = vst [vmem:[#allocation2 + $0x8] sm:$0xff] %v67
    $region29: #{tpu_custom_call.1} parent=1 // pred_fallthru
      _
    %v70 = vld [vmem:[#allocation2] sm:$0xff]
    %v71 = vld [vmem:[#allocation2 + $0x8] sm:$0xff]
    %v72 = vld [vmem:[#allocation5] sm:$0xff]
    %v73 = vld [vmem:[#allocation5 + $0x8] sm:$0xff]
    %v74 = vld [vmem:[#allocation8] sm:$0xff]
    %v75 = vld [vmem:[#allocation8 + $0x8] sm:$0xff]
    %v76 = vld [vmem:[#allocation8 + $0x10] sm:$0xff]
    %v77 = vld [vmem:[#allocation8 + $0x18] sm:$0xff]
    %v78 = vld [vmem:[#allocation8 + $0x20] sm:$0xff]
    %v79 = vld [vmem:[#allocation8 + $0x28] sm:$0xff]
    %v80 = vld [vmem:[#allocation8 + $0x30] sm:$0xff]
    %v81 = vld [vmem:[#allocation8 + $0x38] sm:$0xff]
    %v82 = vld [vmem:[#allocation8 + $0x40] sm:$0xff]
    %v83 = vld [vmem:[#allocation8 + $0x48] sm:$0xff]
    %v84 = vld [vmem:[#allocation8 + $0x50] sm:$0xff]
    %v85 = vld [vmem:[#allocation8 + $0x58] sm:$0xff]
    %v86 = vld [vmem:[#allocation8 + $0x60] sm:$0xff]
    %v87 = vld [vmem:[#allocation8 + $0x68] sm:$0xff]
    %v88 = vld [vmem:[#allocation8 + $0x70] sm:$0xff]
    %v89 = vld [vmem:[#allocation8 + $0x78] sm:$0xff]
    %90 = vmatpush.msra.mxu0 %v89
    %91 = vmatpush.msra.mxu0 %v88
    %92 = vmatpush.msra.mxu0 %v87
    %93 = vmatpush.msra.mxu0 %v86
    %94 = vmatpush.msra.mxu0 %v85
    %95 = vmatpush.msra.mxu0 %v84
    %96 = vmatpush.msra.mxu0 %v83
    %97 = vmatpush.msra.mxu0 %v82
    %98 = vmatpush.msra.mxu0 %v81
    %99 = vmatpush.msra.mxu0 %v80
    %100 = vmatpush.msra.mxu0 %v79
    %101 = vmatpush.msra.mxu0 %v78
    %102 = vmatpush.msra.mxu0 %v77
    %103 = vmatpush.msra.mxu0 %v76
    %104 = vmatpush.msra.mxu0 %v75
    %105 = vmatpush.msra.mxu0 %v74
    %106 = vmatmul.f32.gmra.mxu0 %v72
    %v107 = vpop.f32.mrf.mxu0
    %v108 = vadd.f32 0.0, %v107
    %109 = vmatmul.f32.gmra.mxu0 %v73
    %v110 = vpop.f32.mrf.mxu0
    %v111 = vadd.f32 0.0, %v110
    %112 = vdwg.mxu0
    %v113 = vadd.f32 %v70, %v108
    %v114 = vadd.f32 %v71, %v111
    %115 = vst [vmem:[#allocation2] sm:$0xff] %v113
    %116 = vst [vmem:[#allocation2 + $0x8] sm:$0xff] %v114
    // Predicated region
    $region30: #{tpu_custom_call.1} parent=1 // pred_check
      %p117 = pneg %p62
    $region31: #{tpu_custom_call.1} parent=1 // pred_check_branch
      %119 = sbr.rel (%p117) target = $region33
    $region32: #{tpu_custom_call.1} parent=1 // pred_region
      %v120 = vld [vmem:[#allocation2] sm:$0xff]
      %v121 = vld [vmem:[#allocation2 + $0x8] sm:$0xff]
      %v122 = vld [vmem:[#allocation10 + $0x1] sm:$0x1]
      %v123 = vld [vmem:[#allocation10 + $0x2] sm:$0x1]
      %124 = vadd.xlane.f32.xlu0 %v120
      %v125 = vpop.xlane.xlu0 %124
      %126 = vadd.xlane.f32.xlu0 %v121
      %v127 = vpop.xlane.xlu0 %126
      %v128 = vmul.f32 %v125, 0.03125
      %v129 = vmul.f32 %v127, 0.03125
      %v130 = vlaneseq
      %v131 = vand.u32 %v130, 127
      %vm132 = vcmp.lt.s32.totalorder %v131, 32
      %v133 = vsub.f32 %v120, %v128
      %v134 = vsub.f32 %v121, %v129
      %v135 = vsel %vm132, %v133, 0.0
      %v136 = vsel %vm132, %v134, 0.0
      %v137 = vmul.f32 %v135, %v135
      %v138 = vmul.f32 %v136, %v136
      %139 = vadd.xlane.f32.xlu0 %v137
      %v140 = vpop.xlane.xlu0 %139
      %141 = vadd.xlane.f32.xlu0 %v138
      %v142 = vpop.xlane.xlu0 %141
      %v143 = vmul.f32 %v140, 0.03125
      %v144 = vmul.f32 %v142, 0.03125
      %v145 = vadd.f32 %v143, 1e-05
      %v146 = vadd.f32 %v144, 1e-05
      %v147 = vrsqrt.pop %v145
      %v148 = vmul.f32 %v147, %v145
      %v149 = vmul.f32 %v148, %v147
      %v150 = vmul.f32 0.5, %v149
      %v151 = vsub.f32 1.5, %v150
      %v152 = vmul.f32 %v147, %v151
      %vm153 = vweird.f32 %v145
      %vm154 = vweird.f32 %v147
      %vm155 = vmor %vm153, %vm154
      %v156 = vsel %vm155, %v147, %v152
      %v157 = vrsqrt.pop %v146
      %v158 = vmul.f32 %v157, %v146
      %v159 = vmul.f32 %v158, %v157
      %v160 = vmul.f32 0.5, %v159
      %v161 = vsub.f32 1.5, %v160
      %v162 = vmul.f32 %v157, %v161
      %vm163 = vweird.f32 %v146
      %vm164 = vweird.f32 %v157
      %vm165 = vmor %vm163, %vm164
      %v166 = vsel %vm165, %v157, %v162
      %v167 = vmul.f32 %v135, %v156
      %v168 = vmul.f32 %v136, %v166
      %v169 = vperm.slane %v122, 0
      %v170 = vmul.f32 %v167, %v169
      %v171 = vmul.f32 %v168, %v169
      %v172 = vperm.slane %v123, 0
      %v173 = vadd.f32 %v170, %v172
      %v174 = vadd.f32 %v171, %v172
      %v175 = vmul.f32 %v173, 0.5
      %v176 = vmul.f32 %v174, 0.5
      %v177 = vmul.f32 %v173, 0.70710677
      %v178 = vmul.f32 %v174, 0.70710677
      %v179 = vmul.f32 %v177, %v177
      %v180 = vmin.f32 16.0, %v179
      %v181 = vmul.f32 %v180, 2.1237322e-06
      %v182 = vadd.f32 %v181, 0.00028619796
      %v183 = vmul.f32 %v180, %v182
      %v184 = vadd.f32 %v183, 0.0036580483
      %v185 = vmul.f32 %v180, %v184
      %v186 = vadd.f32 %v185, 0.05243302
      %v187 = vmul.f32 %v180, %v186
      %v188 = vadd.f32 %v187, 0.18741608
      %v189 = vmul.f32 %v180, %v188
      %v190 = vadd.f32 %v189, 1.1283791
      %v191 = vmul.f32 %v177, %v190
      %v192 = vmul.f32 %v180, 3.8918573e-05
      %v193 = vadd.f32 %v192, 0.001143296
      %v194 = vmul.f32 %v180, %v193
      %v195 = vadd.f32 %v194, 0.014752088
      %v196 = vmul.f32 %v180, %v195
      %v197 = vadd.f32 %v196, 0.112945676
      %v198 = vmul.f32 %v180, %v197
      %v199 = vadd.f32 %v198, 0.4994258
      %v200 = vmul.f32 %v180, %v199
      %v201 = vadd.f32 %v200, 1.0
      %v202 = vrcp.pop %v201
      %v203 = vmul.f32 %v201, %v202
      %v204 = vsub.f32 1.0, %v203
      %v205 = vmul.f32 %v202, %v204
      %v206 = vadd.f32 %v202, %v205
      %vm207 = vweird.f32 %v201
      %vm208 = vweird.f32 %v202
      %vm209 = vmor %vm207, %vm208
      %v210 = vsel %vm209, %v202, %v206
      %v211 = vand.u32 2147483647, %v201
      %vm212 = vcmp.eq.f32.partialorder %v211, 8.507059e+37
      %v213 = vand.u32 %v201, 2147483648
      %v214 = vor.u32 1.1754944e-38, %v213
      %v215 = vsel %vm212, %v214, %v210
      %v216 = vmul.f32 %v191, %v215
      %v217 = vmin.f32 %v216, 1.0
      %v218 = vmax.f32 %v217, -1.0
      %v219 = vmul.f32 %v178, %v178
      %v220 = vmin.f32 16.0, %v219
      %v221 = vmul.f32 %v220, 2.1237322e-06
      %v222 = vadd.f32 %v221, 0.00028619796
      %v223 = vmul.f32 %v220, %v222
      %v224 = vadd.f32 %v223, 0.0036580483
      %v225 = vmul.f32 %v220, %v224
      %v226 = vadd.f32 %v225, 0.05243302
      %v227 = vmul.f32 %v220, %v226
      %v228 = vadd.f32 %v227, 0.18741608
      %v229 = vmul.f32 %v220, %v228
      %v230 = vadd.f32 %v229, 1.1283791
      %v231 = vmul.f32 %v178, %v230
      %v232 = vmul.f32 %v220, 3.8918573e-05
      %v233 = vadd.f32 %v232, 0.001143296
      %v234 = vmul.f32 %v220, %v233
      %v235 = vadd.f32 %v234, 0.014752088
      %v236 = vmul.f32 %v220, %v235
      %v237 = vadd.f32 %v236, 0.112945676
      %v238 = vmul.f32 %v220, %v237
      %v239 = vadd.f32 %v238, 0.4994258
      %v240 = vmul.f32 %v220, %v239
      %v241 = vadd.f32 %v240, 1.0
      %v242 = vrcp.pop %v241
      %v243 = vmul.f32 %v241, %v242
      %v244 = vsub.f32 1.0, %v243
      %v245 = vmul.f32 %v242, %v244
      %v246 = vadd.f32 %v242, %v245
      %vm247 = vweird.f32 %v241
      %vm248 = vweird.f32 %v242
      %vm249 = vmor %vm247, %vm248
      %v250 = vsel %vm249, %v242, %v246
      %v251 = vand.u32 2147483647, %v241
      %vm252 = vcmp.eq.f32.partialorder %v251, 8.507059e+37
      %v253 = vand.u32 %v241, 2147483648
      %v254 = vor.u32 1.1754944e-38, %v253
      %v255 = vsel %vm252, %v254, %v250
      %v256 = vmul.f32 %v231, %v255
      %v257 = vmin.f32 %v256, 1.0
      %v258 = vmax.f32 %v257, -1.0
      %v259 = vadd.f32 %v218, 1.0
      %v260 = vadd.f32 %v258, 1.0
      %v261 = vmul.f32 %v175, %v259
      %v262 = vmul.f32 %v176, %v260
      %263 = vst [vmem:[#allocation11] sm:$0xff] %v261
      %264 = vst [vmem:[#allocation11 + $0x8] sm:$0xff] %v262
    $region33: #{tpu_custom_call.1} parent=1 // pred_fallthru
      _
    // Predicated region
    $region34: #{tpu_custom_call.1} parent=1 // pred_check
      _
    $region35: #{tpu_custom_call.1} parent=1 // pred_check_branch
      %266 = sbr.rel (0) target = $region37
    $region36: #{tpu_custom_call.1} parent=1 // pred_region
      %268 = vsyncadd [#allocation7], 0
      %s269 = sshll.u32 [#allocation11], 4
      %s270 = int_to_ptr.vmem [resolvable:$true] %s269
      %s271 = sshll.u32 %s4, 4
      %s272 = int_to_ptr.hbm [resolvable:$true] %s271
      %277 = dma.vmem_to_hbm [thread:$0]  %s270, 256, %s272, [#allocation7], 128, 128, 8
    $region37: #{tpu_custom_call.1} parent=1 // pred_fallthru
      _
    // Predicated region
    $region38: #{tpu_custom_call.1} parent=1 // pred_check
      _
    $region39: #{tpu_custom_call.1} parent=1 // pred_check_branch
      %279 = sbr.rel (0) target = $region41
    $region40: #{tpu_custom_call.1} parent=1 // pred_region
      %281 = dma.done [#allocation7], 256
    $region41: #{tpu_custom_call.1} parent=1 // pred_fallthru
      _
    %282 = vsyncpa [#allocation6], 1
    %283 = vsyncpa [#allocation9], 1
    %284 = vsyncpa [#allocation7], 1

</llo_original>
